<compile_context>
chip_gen: v5e
topology: v5e:2x2
jax: 0.10.0
libtpu: 0.0.40
codegen_flags: <defaults>
</compile_context>

<pallas_src>
import math
from functools import partial

import jax
import jax.numpy as jnp
from jax import lax
from jax.experimental import pallas as pl
from jax.experimental.pallas import tpu as pltpu


# --------------------------- tiling / VMEM helpers ---------------------------


def _m_tile(M, cap=512):
    """Row tile: keep the whole M resident when it fits (weight-stationary);
    otherwise the largest multiple-of-8 divisor <= cap."""
    if M <= cap:
        return M
    tm = cap - (cap % 8)
    while tm >= 8 and M % tm != 0:
        tm -= 8
    return tm if tm >= 8 and M % tm == 0 else M


def _n_tile(N, cap=768):
    """Lane-dim tile: multiple of 128 dividing N, <= cap."""
    if N % 128 != 0:
        return N
    tn = min(cap, N)
    while N % tn != 0 or tn % 128 != 0:
        tn -= 128
    return tn


_VMEM_CAP_CACHE = None


def _vmem_cap():
    """~75% of physical VMEM; 48 MiB fallback (safe on v7x's 64 MiB/TC,
    conservative on v5e/v6e's 128 MiB)."""
    global _VMEM_CAP_CACHE
    if _VMEM_CAP_CACHE is None:
        cap = 48 << 20
        try:
            info = pltpu.get_tpu_info()
            phys = int(getattr(info, "vmem_capacity_bytes", 0) or 0)
            if phys > 0:
                cap = max(16 << 20, (3 * phys) // 4)
        except Exception:
            pass
        _VMEM_CAP_CACHE = int(cap)
    return _VMEM_CAP_CACHE


def _vmem_limit(*block_specs):
    """Explicit scoped-VMEM budget: 2x (double buffers) * sum(blocks) + slack."""
    total = 0
    for shape, dtype in block_specs:
        n = 1
        for d in shape:
            n *= int(d)
        total += n * jnp.dtype(dtype).itemsize
    return int(min(max(2 * total + (4 << 20), 16 << 20), _vmem_cap()))


# ------------------------------ Pallas kernels ------------------------------


def _dense_kernel(x_ref, w_ref, b_ref, o_ref):
    acc = jnp.dot(x_ref[...].astype(jnp.bfloat16), w_ref[...],
                  preferred_element_type=jnp.float32)
    o_ref[...] = (acc + b_ref[...]).astype(o_ref.dtype)


def dense(x, w, b, out_dtype=None):
    """y = x @ w + b.  Weight-stationary grid: N (weight columns) is the OUTER
    axis, M the inner one, so each (K, tn) weight block is DMA'd once total and
    the two TensorCores split disjoint weight column tiles."""
    M, K = x.shape
    _, N = w.shape
    out_dtype = out_dtype or x.dtype
    tm = _m_tile(M)
    tn = _n_tile(N)
    vmem = _vmem_limit(((tm, K), x.dtype), ((K, tn), w.dtype),
                       ((1, tn), b.dtype), ((tm, tn), out_dtype))
    return pl.pallas_call(
        _dense_kernel,
        out_shape=jax.ShapeDtypeStruct((M, N), out_dtype),
        grid_spec=pltpu.PrefetchScalarGridSpec(
            num_scalar_prefetch=0,
            grid=(N // tn, M // tm),              # j outer, i inner (weight-stationary)
            in_specs=[
                pl.BlockSpec((tm, K), lambda j, i: (i, 0)),
                pl.BlockSpec((K, tn), lambda j, i: (0, j)),
                pl.BlockSpec((1, tn), lambda j, i: (0, j)),
            ],
            out_specs=pl.BlockSpec((tm, tn), lambda j, i: (i, j)),
        ),
        compiler_params=pltpu.CompilerParams(
            dimension_semantics=("parallel", "parallel"),
            vmem_limit_bytes=vmem),
    )(x, w, b.reshape(1, N))


def _dense_res_ln_kernel(x_ref, w_ref, b_ref, r_ref, g_ref, bt_ref, o_ref, *, eps):
    acc = jnp.dot(x_ref[...].astype(jnp.bfloat16), w_ref[...],
                  preferred_element_type=jnp.float32)
    v = acc + b_ref[...] + r_ref[...]
    mu = jnp.mean(v, axis=-1, keepdims=True)
    var = jnp.mean(jnp.square(v - mu), axis=-1, keepdims=True)
    o_ref[...] = ((v - mu) * lax.rsqrt(var + eps) * g_ref[...]
                  + bt_ref[...]).astype(o_ref.dtype)


def dense_residual_ln(x, w, b, res, gamma, beta, eps=1e-12):
    """LayerNorm(x @ w + b + res) over the last axis, fused (full H per M-tile)."""
    M, K = x.shape
    _, H = w.shape
    tm = _m_tile(M)
    vmem = _vmem_limit(((tm, K), x.dtype), ((K, H), w.dtype), ((tm, H), res.dtype),
                       ((1, H), b.dtype), ((1, H), gamma.dtype), ((1, H), beta.dtype),
                       ((tm, H), res.dtype))
    return pl.pallas_call(
        partial(_dense_res_ln_kernel, eps=eps),
        out_shape=jax.ShapeDtypeStruct((M, H), res.dtype),
        grid_spec=pltpu.PrefetchScalarGridSpec(
            num_scalar_prefetch=0,
            grid=(M // tm,),
            in_specs=[
                pl.BlockSpec((tm, K), lambda i: (i, 0)),
                pl.BlockSpec((K, H), lambda i: (0, 0)),
                pl.BlockSpec((1, H), lambda i: (0, 0)),
                pl.BlockSpec((tm, H), lambda i: (i, 0)),
                pl.BlockSpec((1, H), lambda i: (0, 0)),
                pl.BlockSpec((1, H), lambda i: (0, 0)),
            ],
            out_specs=pl.BlockSpec((tm, H), lambda i: (i, 0)),
        ),
        compiler_params=pltpu.CompilerParams(
            dimension_semantics=("parallel",),
            vmem_limit_bytes=vmem),
    )(x, w, b.reshape(1, H), res, gamma.reshape(1, H), beta.reshape(1, H))


def _ffn_kernel(x_ref, w1_ref, b1_ref, w2_ref, b2_ref, g_ref, bt_ref,
                o_ref, acc_ref, *, eps):
    @pl.when(pl.program_id(1) == 0)
    def _():
        acc_ref[...] = jnp.zeros_like(acc_ref)

    h = jnp.dot(x_ref[...].astype(jnp.bfloat16), w1_ref[...],
                preferred_element_type=jnp.float32) + b1_ref[...]
    # tanh-approx GELU.  TODO(synk): HF BERT uses erf GELU; tanh approx differs slightly.
    h = 0.5 * h * (1.0 + jnp.tanh(
        0.7978845608028654 * (h + 0.044715 * h * h * h)))
    acc_ref[...] += jnp.dot(h.astype(jnp.bfloat16), w2_ref[...],
                            preferred_element_type=jnp.float32)

    @pl.when(pl.program_id(1) == pl.num_programs(1) - 1)
    def _():
        v = acc_ref[...] + b2_ref[...] + x_ref[...]      # + bias + residual (= x)
        mu = jnp.mean(v, axis=-1, keepdims=True)
        var = jnp.mean(jnp.square(v - mu), axis=-1, keepdims=True)
        o_ref[...] = ((v - mu) * lax.rsqrt(var + eps) * g_ref[...]
                      + bt_ref[...]).astype(o_ref.dtype)


def ffn_residual_ln(x, w1, b1, w2, b2, gamma, beta, eps=1e-12):
    """LayerNorm(x + gelu(x @ w1 + b1) @ w2 + b2), fully fused: the 3072-wide
    intermediate is a reduction grid axis accumulated in a VMEM f32 scratch,
    so it never makes an HBM round trip."""
    M, H = x.shape
    I = w1.shape[1]
    tm = _m_tile(M)
    tk = _n_tile(I, cap=1024)
    vmem = _vmem_limit(((tm, H), x.dtype), ((H, tk), w1.dtype), ((1, tk), b1.dtype),
                       ((tk, H), w2.dtype), ((1, H), b2.dtype), ((1, H), gamma.dtype),
                       ((1, H), beta.dtype), ((tm, H), x.dtype), ((tm, H), jnp.float32))
    return pl.pallas_call(
        partial(_ffn_kernel, eps=eps),
        out_shape=jax.ShapeDtypeStruct((M, H), x.dtype),
        grid_spec=pltpu.PrefetchScalarGridSpec(
            num_scalar_prefetch=0,
            grid=(M // tm, I // tk),              # reduction axis last, "arbitrary"
            in_specs=[
                pl.BlockSpec((tm, H), lambda i, k: (i, 0)),
                pl.BlockSpec((H, tk), lambda i, k: (0, k)),
                pl.BlockSpec((1, tk), lambda i, k: (0, k)),
                pl.BlockSpec((tk, H), lambda i, k: (k, 0)),
                pl.BlockSpec((1, H), lambda i, k: (0, 0)),
                pl.BlockSpec((1, H), lambda i, k: (0, 0)),
                pl.BlockSpec((1, H), lambda i, k: (0, 0)),
            ],
            out_specs=pl.BlockSpec((tm, H), lambda i, k: (i, 0)),
            scratch_shapes=[pltpu.VMEM((tm, H), jnp.float32)],
        ),
        compiler_params=pltpu.CompilerParams(
            dimension_semantics=("parallel", "arbitrary"),
            vmem_limit_bytes=vmem),
    )(x, w1, b1.reshape(1, I), w2, b2.reshape(1, H),
      gamma.reshape(1, H), beta.reshape(1, H))


def _ln_kernel(x_ref, g_ref, b_ref, o_ref, *, eps):
    v = x_ref[...]
    mu = jnp.mean(v, axis=-1, keepdims=True)
    var = jnp.mean(jnp.square(v - mu), axis=-1, keepdims=True)
    o_ref[...] = ((v - mu) * lax.rsqrt(var + eps) * g_ref[...]
                  + b_ref[...]).astype(o_ref.dtype)


def layernorm(x, gamma, beta, eps=1e-12):
    """Standalone LayerNorm (embeddings)."""
    M, H = x.shape
    tm = _m_tile(M)
    vmem = _vmem_limit(((tm, H), x.dtype), ((1, H), gamma.dtype),
                       ((1, H), beta.dtype), ((tm, H), x.dtype))
    return pl.pallas_call(
        partial(_ln_kernel, eps=eps),
        out_shape=jax.ShapeDtypeStruct((M, H), x.dtype),
        grid_spec=pltpu.PrefetchScalarGridSpec(
            num_scalar_prefetch=0,
            grid=(M // tm,),
            in_specs=[
                pl.BlockSpec((tm, H), lambda i: (i, 0)),
                pl.BlockSpec((1, H), lambda i: (0, 0)),
                pl.BlockSpec((1, H), lambda i: (0, 0)),
            ],
            out_specs=pl.BlockSpec((tm, H), lambda i: (i, 0)),
        ),
        compiler_params=pltpu.CompilerParams(
            dimension_semantics=("parallel",),
            vmem_limit_bytes=vmem),
    )(x, gamma.reshape(1, H), beta.reshape(1, H))


def _attn_pair_kernel(q_ref, k_ref, v_ref, m_ref, o_ref, *, d, scale):
    # q/k/v blocks hold two 64-lane heads side by side (128-lane aligned slab).
    mrow = m_ref[0]                                   # (1, S) additive key mask
    ctxs = []
    for hh in range(2):                               # at most 2 live score tiles
        qh = q_ref[0, :, hh * d:(hh + 1) * d]
        kh = k_ref[0, :, hh * d:(hh + 1) * d]
        vh = v_ref[0, :, hh * d:(hh + 1) * d]
        # scores: contract head_dim of q against head_dim of k (K untransposed)
        s = lax.dot_general(qh, kh, (((1,), (1,)), ((), ())),
                            preferred_element_type=jnp.float32)
        s = s * scale + mrow
        s = s - jnp.max(s, axis=-1, keepdims=True)
        p = jnp.exp(s)
        inv = pl.reciprocal(jnp.sum(p, axis=-1, keepdims=True), approx=True)
        ctxs.append(jnp.dot((p * inv).astype(jnp.bfloat16), vh,
                            preferred_element_type=jnp.float32))
    # single lane-dense (S, 128) store for the head pair
    o_ref[0] = jnp.concatenate(ctxs, axis=-1).astype(o_ref.dtype)


def attention(qkv, mask_add, num_heads, head_dim):
    """qkv: (B, S, 3H) bf16 fused projections; mask_add: (B, 1, S) additive mask.
    Grid = (batch, head-pair): each step DMAs only 128-lane-aligned (S, 128)
    Q/K/V slices, keeping VMEM bounded at large S (v7x-safe).
    TODO(synk): add flash-style key tiling for S >> 1024."""
    B, S, H3 = qkv.shape
    H = H3 // 3
    d2 = 2 * head_dim                                 # 128 lanes per grid step
    npair = num_heads // 2
    scale = 1.0 / math.sqrt(head_dim)
    vmem = _vmem_limit(((1, S, d2), qkv.dtype), ((1, S, d2), qkv.dtype),
                       ((1, S, d2), qkv.dtype), ((1, 1, S), mask_add.dtype),
                       ((1, S, d2), qkv.dtype))
    return pl.pallas_call(
        partial(_attn_pair_kernel, d=head_dim, scale=scale),
        out_shape=jax.ShapeDtypeStruct((B, S, H), qkv.dtype),
        grid_spec=pltpu.PrefetchScalarGridSpec(
            num_scalar_prefetch=0,
            grid=(B, npair),
            in_specs=[
                pl.BlockSpec((1, S, d2), lambda b, p: (b, 0, p)),                  # Q pair
                pl.BlockSpec((1, S, d2), lambda b, p, n=npair: (b, 0, n + p)),     # K pair
                pl.BlockSpec((1, S, d2), lambda b, p, n=npair: (b, 0, 2 * n + p)), # V pair
                pl.BlockSpec((1, 1, S), lambda b, p: (b, 0, 0)),
            ],
            out_specs=pl.BlockSpec((1, S, d2), lambda b, p: (b, 0, p)),
        ),
        compiler_params=pltpu.CompilerParams(
            dimension_semantics=("parallel", "parallel"),
            vmem_limit_bytes=vmem),
    )(qkv, qkv, qkv, mask_add)


def _pool_cls_kernel(x_ref, wp_ref, bp_ref, wc_ref, bc_ref, o_ref):
    pooled = jnp.tanh(
        jnp.dot(x_ref[...].astype(jnp.bfloat16), wp_ref[...],
                preferred_element_type=jnp.float32) + bp_ref[...])
    # dropout: identity (eval).  TODO(synk): training-mode dropout via pltpu.prng_*.
    logits = jnp.dot(pooled.astype(jnp.bfloat16), wc_ref[...],
                     preferred_element_type=jnp.float32) + bc_ref[...]
    o_ref[...] = jnp.maximum(logits, 0.0).astype(o_ref.dtype)


def pooler_classifier(cls, wp, bp, wc, bc):
    """Fused BERT pooler (dense+tanh) + classifier head (Linear(768,10)+ReLU).
    Classifier columns zero-padded to 128 lanes for an unmasked lane-dense store;
    logits sliced back to C outside the kernel."""
    B, H = cls.shape
    C = wc.shape[1]
    CP = ((C + 127) // 128) * 128
    wc_p = jnp.zeros((H, CP), wc.dtype).at[:, :C].set(wc)
    bc_p = jnp.zeros((CP,), bc.dtype).at[:C].set(bc)
    vmem = _vmem_limit(((B, H), cls.dtype), ((H, H), wp.dtype), ((H, CP), wc.dtype),
                       ((1, H), bp.dtype), ((1, CP), bc.dtype), ((B, CP), jnp.float32))
    out = pl.pallas_call(
        _pool_cls_kernel,
        out_shape=jax.ShapeDtypeStruct((B, CP), jnp.float32),
        grid_spec=pltpu.PrefetchScalarGridSpec(
            num_scalar_prefetch=0,
            grid=(1,),
            in_specs=[
                pl.BlockSpec((B, H), lambda i: (0, 0)),
                pl.BlockSpec((H, H), lambda i: (0, 0)),
                pl.BlockSpec((1, H), lambda i: (0, 0)),
                pl.BlockSpec((H, CP), lambda i: (0, 0)),
                pl.BlockSpec((1, CP), lambda i: (0, 0)),
            ],
            out_specs=pl.BlockSpec((B, CP), lambda i: (0, 0)),
        ),
        compiler_params=pltpu.CompilerParams(
            dimension_semantics=("arbitrary",),
            vmem_limit_bytes=vmem),
    )(cls, wp, bp.reshape(1, H), wc_p, bc_p.reshape(1, CP))
    return out[:, :C]


# --------------------------- model (glue in JAX) ----------------------------


class Config:
    vocab_size = 100
    hidden = 768          # fixed by Linear(768, 10) in the PyTorch module
    num_heads = 12
    head_dim = 64
    num_layers = 2        # reduced (bert-base has 12) to keep the example small
    intermediate = 3072
    max_pos = 32
    type_vocab = 2
    num_classes = 10
    ln_eps = 1e-12


def init_params(key, cfg):
    def nrm(key, shape, scale=0.02):
        return scale * jax.random.normal(key, shape, dtype=jnp.float32)

    def wgt(key, shape):   # matmul weights stored bf16 (halves HBM/DMA traffic)
        return nrm(key, shape).astype(jnp.bfloat16)

    keys = iter(jax.random.split(key, 64))
    p = {
        "word_emb": nrm(next(keys), (cfg.vocab_size, cfg.hidden)),
        "pos_emb": nrm(next(keys), (cfg.max_pos, cfg.hidden)),
        "type_emb": nrm(next(keys), (cfg.type_vocab, cfg.hidden)),
        "emb_ln_g": jnp.ones((cfg.hidden,), jnp.float32),
        "emb_ln_b": jnp.zeros((cfg.hidden,), jnp.float32),
        "layers": [],
        "pool_w": wgt(next(keys), (cfg.hidden, cfg.hidden)),
        "pool_b": jnp.zeros((cfg.hidden,), jnp.float32),
        "cls_w": wgt(next(keys), (cfg.hidden, cfg.num_classes)),
        "cls_b": jnp.zeros((cfg.num_classes,), jnp.float32),
    }
    for _ in range(cfg.num_layers):
        lyr = {
            "wqkv": wgt(next(keys), (cfg.hidden, 3 * cfg.hidden)),   # fused Q|K|V
            "bqkv": jnp.zeros((3 * cfg.hidden,), jnp.float32),
            "wo": wgt(next(keys), (cfg.hidden, cfg.hidden)),
            "bo": jnp.zeros((cfg.hidden,), jnp.float32),
            "ln1_g": jnp.ones((cfg.hidden,), jnp.float32),
            "ln1_b": jnp.zeros((cfg.hidden,), jnp.float32),
            "w1": wgt(next(keys), (cfg.hidden, cfg.intermediate)),
            "b1": jnp.zeros((cfg.intermediate,), jnp.float32),
            "w2": wgt(next(keys), (cfg.intermediate, cfg.hidden)),
            "b2": jnp.zeros((cfg.hidden,), jnp.float32),
            "ln2_g": jnp.ones((cfg.hidden,), jnp.float32),
            "ln2_b": jnp.zeros((cfg.hidden,), jnp.float32),
        }
        p["layers"].append(lyr)
    return p


def bert_classifier_forward(params, input_ids, attention_mask, cfg):
    B, S = input_ids.shape
    H, NH, D = cfg.hidden, cfg.num_heads, cfg.head_dim

    # ---- embeddings (gathers are XLA glue; LayerNorm runs in Pallas) ----
    # TODO(synk): token_type_ids hard-coded to type 0.
    x = (params["word_emb"][input_ids]
         + params["pos_emb"][:S][None, :, :]
         + params["type_emb"][0][None, None, :])                    # (B, S, H) f32
    x2d = layernorm(x.reshape(B * S, H),
                    params["emb_ln_g"], params["emb_ln_b"], cfg.ln_eps)

    # additive attention mask, HF convention: (1 - mask) * -10000, compact (B,1,S)
    mask_add = ((1.0 - attention_mask.astype(jnp.float32)) * -10000.0).reshape(B, 1, S)

    for lyr in params["layers"]:
        # ---- self-attention: fused QKV projection (bf16 out) + per-(batch, head-pair) attention
        qkv = dense(x2d, lyr["wqkv"], lyr["bqkv"], out_dtype=jnp.bfloat16)  # (B*S, 3H) bf16
        ctx = attention(qkv.reshape(B, S, 3 * H), mask_add, NH, D)          # (B, S, H) bf16
        # output projection + residual + LayerNorm (fused epilogue), f32 residual stream
        x2d = dense_residual_ln(ctx.reshape(B * S, H), lyr["wo"], lyr["bo"],
                                x2d, lyr["ln1_g"], lyr["ln1_b"], cfg.ln_eps)
        # ---- feed-forward: up(gelu) + down + residual + LayerNorm, one fused kernel
        x2d = ffn_residual_ln(x2d, lyr["w1"], lyr["b1"], lyr["w2"], lyr["b2"],
                              lyr["ln2_g"], lyr["ln2_b"], cfg.ln_eps)

    # ---- pooler (dense+tanh on [CLS]) + dropout(eval) + Linear(768,10) + ReLU ----
    cls = x2d.reshape(B, S, H)[:, 0, :]                              # (B, H)
    logits = pooler_classifier(cls, params["pool_w"], params["pool_b"],
                               params["cls_w"], params["cls_b"])     # (B, 10)
    return logits


if __name__ == "__main__":
    cfg = Config()
    key = jax.random.PRNGKey(0)
    kp, ki = jax.random.split(key)

    params = init_params(kp, cfg)

    B, S = 2, 8
    input_ids = jax.random.randint(ki, (B, S), 0, cfg.vocab_size, dtype=jnp.int32)
    # second sequence has its last two tokens masked out
    lens = jnp.array([[S], [S - 2]], dtype=jnp.int32)
    attention_mask = (jnp.arange(S)[None, :] < lens).astype(jnp.float32)

    out = bert_classifier_forward(params, input_ids, attention_mask, cfg)
    out = jax.block_until_ready(out)

    assert out.shape == (B, cfg.num_classes), out.shape
    assert bool(jnp.all(out >= 0.0))          # ReLU output is non-negative
    assert bool(jnp.all(jnp.isfinite(out)))
    print("KERNEL_OK")
</pallas_src>

<mosaic_0001>
module attributes {stable_mosaic.version = 11 : i64} {
  func.func @_ln_kernel(%arg0: i32, %arg1: memref<16x768xf32, #tpu.memory_space<vmem>>, %arg2: memref<1x768xf32, #tpu.memory_space<vmem>>, %arg3: memref<1x768xf32, #tpu.memory_space<vmem>>, %arg4: memref<16x768xf32, #tpu.memory_space<vmem>>) attributes {dimension_semantics = [#tpu.dimension_semantics<parallel>], iteration_bounds = array<i64: 1>, scalar_prefetch = 0 : i64, scratch_operands = 0 : i64, tpu.core_type = #tpu.core_type<tc>, window_params = [{transform_indices = @transform_0, window_bounds = array<i64: 16, 768>}, {pipeline_mode = #tpu.pipeline_mode<synchronous>, transform_indices = @transform_1, window_bounds = array<i64: 1, 768>}, {pipeline_mode = #tpu.pipeline_mode<synchronous>, transform_indices = @transform_2, window_bounds = array<i64: 1, 768>}, {transform_indices = @transform_3, window_bounds = array<i64: 16, 768>}]} {
    %c0 = arith.constant 0 : index
    %c0_0 = arith.constant 0 : index
    %0 = vector.load %arg1[%c0, %c0_0] : memref<16x768xf32, #tpu.memory_space<vmem>>, vector<16x768xf32>
    %cst = arith.constant dense<0.000000e+00> : vector<16xf32>
    %1 = vector.multi_reduction <add>, %0, %cst [1] : vector<16x768xf32> to vector<16xf32>
    %2 = vector.shape_cast %1 : vector<16xf32> to vector<16x1xf32>
    %cst_1 = arith.constant 7.680000e+02 : f32
    %3 = vector.broadcast %cst_1 : f32 to vector<16x1xf32>
    %4 = arith.divf %2, %3 : vector<16x1xf32>
    %5 = vector.broadcast %4 : vector<16x1xf32> to vector<16x768xf32>
    %6 = arith.subf %0, %5 : vector<16x768xf32>
    %7 = arith.mulf %6, %6 : vector<16x768xf32>
    %cst_2 = arith.constant dense<0.000000e+00> : vector<16xf32>
    %8 = vector.multi_reduction <add>, %7, %cst_2 [1] : vector<16x768xf32> to vector<16xf32>
    %9 = vector.shape_cast %8 : vector<16xf32> to vector<16x1xf32>
    %cst_3 = arith.constant 7.680000e+02 : f32
    %10 = vector.broadcast %cst_3 : f32 to vector<16x1xf32>
    %11 = arith.divf %9, %10 : vector<16x1xf32>
    %12 = vector.broadcast %4 : vector<16x1xf32> to vector<16x768xf32>
    %13 = arith.subf %0, %12 : vector<16x768xf32>
    %cst_4 = arith.constant 9.99999996E-13 : f32
    %14 = vector.broadcast %cst_4 : f32 to vector<16x1xf32>
    %15 = arith.addf %11, %14 : vector<16x1xf32>
    %16 = math.rsqrt %15 : vector<16x1xf32>
    %17 = vector.broadcast %16 : vector<16x1xf32> to vector<16x768xf32>
    %18 = arith.mulf %13, %17 : vector<16x768xf32>
    %c0_5 = arith.constant 0 : index
    %c0_6 = arith.constant 0 : index
    %19 = vector.load %arg2[%c0_5, %c0_6] : memref<1x768xf32, #tpu.memory_space<vmem>>, vector<1x768xf32>
    %20 = vector.broadcast %19 : vector<1x768xf32> to vector<16x768xf32>
    %21 = arith.mulf %18, %20 : vector<16x768xf32>
    %c0_7 = arith.constant 0 : index
    %c0_8 = arith.constant 0 : index
    %22 = vector.load %arg3[%c0_7, %c0_8] : memref<1x768xf32, #tpu.memory_space<vmem>>, vector<1x768xf32>
    %23 = vector.broadcast %22 : vector<1x768xf32> to vector<16x768xf32>
    %24 = arith.addf %21, %23 : vector<16x768xf32>
    %c0_9 = arith.constant 0 : index
    %c0_10 = arith.constant 0 : index
    %25 = vector.load %arg4[%c0_9, %c0_10] : memref<16x768xf32, #tpu.memory_space<vmem>>, vector<16x768xf32>
    tpu.vector_store %arg4[%c0_9, %c0_10], %24 {strides = array<i32>} : memref<16x768xf32, #tpu.memory_space<vmem>>, vector<16x768xf32>,
    return
  }
  func.func @transform_0(%arg0: i32) -> (i32, i32) {
    %c0_i32 = arith.constant 0 : i32
    %c0_i32_0 = arith.constant 0 : i32
    return %arg0, %c0_i32 : i32, i32
  }
  func.func @transform_1(%arg0: i32) -> (i32, i32) {
    %c0_i32 = arith.constant 0 : i32
    %c0_i32_0 = arith.constant 0 : i32
    %c0_i32_1 = arith.constant 0 : i32
    return %c0_i32, %c0_i32_0 : i32, i32
  }
  func.func @transform_2(%arg0: i32) -> (i32, i32) {
    %c0_i32 = arith.constant 0 : i32
    %c0_i32_0 = arith.constant 0 : i32
    %c0_i32_1 = arith.constant 0 : i32
    return %c0_i32, %c0_i32_0 : i32, i32
  }
  func.func @transform_3(%arg0: i32) -> (i32, i32) {
    %c0_i32 = arith.constant 0 : i32
    %c0_i32_0 = arith.constant 0 : i32
    return %arg0, %c0_i32 : i32, i32
  }
}

</mosaic_0001>

<llo_original>
// kernel: tpu_custom_call.1
$region0: #{tpu_custom_call.1}
  #allocation0 [shape = 'u32[]', space=smem, size = 0x4, offset = 0x4, fixed_abs, tag = 'smem constant byte address 0x4 - core index']
  #allocation1 [shape = 'u32[72,128]{1,0:T(1,128)}', space=vmem, size = 0x9000, scoped, tag = 'internal scratch']
  %s0 = inlined_call_operand.hbm [shape: f32[16,768], index: 0, kind: input, shape index: {}]
  %s1 = inlined_call_operand.hbm [shape: f32[1,768], index: 1, kind: input, shape index: {}]
  %s2 = inlined_call_operand.hbm [shape: f32[1,768], index: 2, kind: input, shape index: {}]
  %s3 = inlined_call_operand.hbm [shape: f32[16,768], index: 3, kind: output, shape index: {}]
  %s4 = sld [smem:[#allocation0]]
  $region34: #{tpu_custom_call.1} parent=0
    _
  %s6 = ssub.s32 1, %s4
  %s7 = scalar_select 0, %s6, %s4
  $region1: #{tpu_custom_call.1} parent=0
    #allocation2 [shape = 'u8[49152]{0}', space=vmem, size = 0xc000, scoped, tag = 'input window, operand 0, single buffered']
    #allocation3 [shape = 's32[1]{0}', space=sflag, size = 0x4, scoped, tag = 'scoped memory for tpu_custom_call.1']
    #allocation4 [shape = 's32[1]{0}', space=sflag, size = 0x4, scoped, tag = 'scoped memory for tpu_custom_call.1']
    #allocation5 [shape = 'u8[3072]{0}', space=vmem, size = 0xc00, scoped, tag = 'input window, operand 1, single buffered']
    #allocation6 [shape = 's32[1]{0}', space=sflag, size = 0x4, scoped, tag = 'scoped memory for tpu_custom_call.1']
    #allocation7 [shape = 'u8[3072]{0}', space=vmem, size = 0xc00, scoped, tag = 'input window, operand 2, single buffered']
    #allocation8 [shape = 'u8[49152]{0}', space=vmem, size = 0xc000, scoped, tag = 'output window, operand 0, single buffered']
    %8 = vsyncpa [#allocation3], 0
    %9 = vsyncpa [#allocation6], 0
    %10 = vsyncpa [#allocation4], 0
    // Predicated region
    $region2: #{tpu_custom_call.1} parent=1 // pred_check
      _
    $region3: #{tpu_custom_call.1} parent=1 // pred_check_branch
      %12 = sbr.rel (0) target = $region5
    $region4: #{tpu_custom_call.1} parent=1 // pred_region
      %14 = vsyncadd [#allocation3], 0
      %s15 = sshll.u32 %s0, 4
      %s16 = int_to_ptr.hbm [resolvable:$true] %s15
      %s17 = sshll.u32 [#allocation2], 4
      %s18 = int_to_ptr.vmem [resolvable:$true] %s17
      %23 = dma.hbm_to_vmem [thread:$0]  %s16, 1536, %s18, [#allocation3], 768, 768, 48
    $region5: #{tpu_custom_call.1} parent=1 // pred_fallthru
      _
    // Predicated region
    $region6: #{tpu_custom_call.1} parent=1 // pred_check
      _
    $region7: #{tpu_custom_call.1} parent=1 // pred_check_branch
      %25 = sbr.rel (0) target = $region9
    $region8: #{tpu_custom_call.1} parent=1 // pred_region
      %27 = vsyncadd [#allocation6], 0
      %s29 = sshll.u32 %s1, 4
      %s30 = int_to_ptr.hbm [resolvable:$true] %s29
      %s31 = sshll.u32 [#allocation5], 4
      %s32 = int_to_ptr.vmem [resolvable:$true] %s31
      %34 = dma.hbm_to_vmem [thread:$0]  %s30, 96, %s32, [#allocation6]
    $region9: #{tpu_custom_call.1} parent=1 // pred_fallthru
      _
    // Predicated region
    $region10: #{tpu_custom_call.1} parent=1 // pred_check
      _
    $region11: #{tpu_custom_call.1} parent=1 // pred_check_branch
      %36 = sbr.rel (0) target = $region13
    $region12: #{tpu_custom_call.1} parent=1 // pred_region
      %38 = vsyncadd [#allocation6], 0
      %s40 = sshll.u32 %s2, 4
      %s41 = int_to_ptr.hbm [resolvable:$true] %s40
      %s42 = sshll.u32 [#allocation7], 4
      %s43 = int_to_ptr.vmem [resolvable:$true] %s42
      %45 = dma.hbm_to_vmem [thread:$0]  %s41, 96, %s43, [#allocation6]
    $region13: #{tpu_custom_call.1} parent=1 // pred_fallthru
      _
    // Predicated region
    $region14: #{tpu_custom_call.1} parent=1 // pred_check
      _
    $region15: #{tpu_custom_call.1} parent=1 // pred_check_branch
      %47 = sbr.rel (0) target = $region17
    $region16: #{tpu_custom_call.1} parent=1 // pred_region
      %49 = dma.done [#allocation3], 1536
    $region17: #{tpu_custom_call.1} parent=1 // pred_fallthru
      _
    // Predicated region
    $region18: #{tpu_custom_call.1} parent=1 // pred_check
      _
    $region19: #{tpu_custom_call.1} parent=1 // pred_check_branch
      %51 = sbr.rel (0) target = $region21
    $region20: #{tpu_custom_call.1} parent=1 // pred_region
      %53 = dma.done [#allocation6], 96
    $region21: #{tpu_custom_call.1} parent=1 // pred_fallthru
      _
    // Predicated region
    $region22: #{tpu_custom_call.1} parent=1 // pred_check
      _
    $region23: #{tpu_custom_call.1} parent=1 // pred_check_branch
      %55 = sbr.rel (0) target = $region25
    $region24: #{tpu_custom_call.1} parent=1 // pred_region
      %57 = dma.done [#allocation6], 96
    $region25: #{tpu_custom_call.1} parent=1 // pred_fallthru
      _
    %v58 = vld [vmem:[#allocation2] sm:$0xff]
    %v59 = vld [vmem:[#allocation2 + $0x8] sm:$0xff]
    %v60 = vld [vmem:[#allocation2 + $0x10] sm:$0xff]
    %v61 = vld [vmem:[#allocation2 + $0x18] sm:$0xff]
    %v62 = vld [vmem:[#allocation2 + $0x20] sm:$0xff]
    %v63 = vld [vmem:[#allocation2 + $0x28] sm:$0xff]
    %v64 = vld [vmem:[#allocation2 + $0x30] sm:$0xff]
    %v65 = vld [vmem:[#allocation2 + $0x38] sm:$0xff]
    %v66 = vld [vmem:[#allocation2 + $0x40] sm:$0xff]
    %v67 = vld [vmem:[#allocation2 + $0x48] sm:$0xff]
    %v68 = vld [vmem:[#allocation2 + $0x50] sm:$0xff]
    %v69 = vld [vmem:[#allocation2 + $0x58] sm:$0xff]
    %v70 = vadd.f32 %v58, %v59
    %v71 = vadd.f32 %v70, %v60
    %v72 = vadd.f32 %v71, %v61
    %v73 = vadd.f32 %v72, %v62
    %v74 = vadd.f32 %v73, %v63
    %75 = vadd.xlane.f32.xlu0 %v74
    %v76 = vpop.xlane.xlu0 %75
    %v77 = vadd.f32 %v64, %v65
    %v78 = vadd.f32 %v77, %v66
    %v79 = vadd.f32 %v78, %v67
    %v80 = vadd.f32 %v79, %v68
    %v81 = vadd.f32 %v80, %v69
    %82 = vadd.xlane.f32.xlu0 %v81
    %v83 = vpop.xlane.xlu0 %82
    %v84 = vrcp.pop 768.0
    %v85 = vmul.f32 768.0, %v84
    %v86 = vsub.f32 1.0, %v85
    %v87 = vmul.f32 %v84, %v86
    %v88 = vadd.f32 %v84, %v87
    %vm89 = vweird.f32 %v84
    %v90 = vsel %vm89, %v84, %v88
    %v91 = vmul.f32 %v76, %v90
    %v92 = vmul.f32 %v83, %v90
    %v93 = vsub.f32 %v58, %v91
    %v94 = vsub.f32 %v59, %v91
    %v95 = vsub.f32 %v60, %v91
    %v96 = vsub.f32 %v61, %v91
    %v97 = vsub.f32 %v62, %v91
    %v98 = vsub.f32 %v63, %v91
    %v99 = vsub.f32 %v64, %v92
    %v100 = vsub.f32 %v65, %v92
    %v101 = vsub.f32 %v66, %v92
    %v102 = vsub.f32 %v67, %v92
    %v103 = vsub.f32 %v68, %v92
    %v104 = vsub.f32 %v69, %v92
    %v105 = vmul.f32 %v93, %v93
    %v106 = vmul.f32 %v94, %v94
    %v107 = vmul.f32 %v95, %v95
    %v108 = vmul.f32 %v96, %v96
    %v109 = vmul.f32 %v97, %v97
    %v110 = vmul.f32 %v98, %v98
    %v111 = vmul.f32 %v99, %v99
    %v112 = vmul.f32 %v100, %v100
    %v113 = vmul.f32 %v101, %v101
    %v114 = vmul.f32 %v102, %v102
    %v115 = vmul.f32 %v103, %v103
    %v116 = vmul.f32 %v104, %v104
    %v117 = vadd.f32 %v105, %v106
    %v118 = vadd.f32 %v117, %v107
    %v119 = vadd.f32 %v118, %v108
    %v120 = vadd.f32 %v119, %v109
    %v121 = vadd.f32 %v120, %v110
    %122 = vadd.xlane.f32.xlu0 %v121
    %v123 = vpop.xlane.xlu0 %122
    %v124 = vadd.f32 %v111, %v112
    %v125 = vadd.f32 %v124, %v113
    %v126 = vadd.f32 %v125, %v114
    %v127 = vadd.f32 %v126, %v115
    %v128 = vadd.f32 %v127, %v116
    %129 = vadd.xlane.f32.xlu0 %v128
    %v130 = vpop.xlane.xlu0 %129
    %v131 = vmul.f32 %v123, %v90
    %v132 = vmul.f32 %v130, %v90
    %v133 = vadd.f32 %v131, 1e-12
    %v134 = vadd.f32 %v132, 1e-12
    %v135 = vrsqrt.pop %v133
    %v136 = vmul.f32 %v135, %v133
    %v137 = vmul.f32 %v136, %v135
    %v138 = vmul.f32 0.5, %v137
    %v139 = vsub.f32 1.5, %v138
    %v140 = vmul.f32 %v135, %v139
    %vm141 = vweird.f32 %v133
    %vm142 = vweird.f32 %v135
    %vm143 = vmor %vm141, %vm142
    %v144 = vsel %vm143, %v135, %v140
    %v145 = vrsqrt.pop %v134
    %v146 = vmul.f32 %v145, %v134
    %v147 = vmul.f32 %v146, %v145
    %v148 = vmul.f32 0.5, %v147
    %v149 = vsub.f32 1.5, %v148
    %v150 = vmul.f32 %v145, %v149
    %vm151 = vweird.f32 %v134
    %vm152 = vweird.f32 %v145
    %vm153 = vmor %vm151, %vm152
    %v154 = vsel %vm153, %v145, %v150
    %v155 = vmul.f32 %v93, %v144
    %v156 = vmul.f32 %v94, %v144
    %v157 = vmul.f32 %v95, %v144
    %v158 = vmul.f32 %v96, %v144
    %v159 = vmul.f32 %v97, %v144
    %v160 = vmul.f32 %v98, %v144
    %v161 = vmul.f32 %v99, %v154
    %v162 = vmul.f32 %v100, %v154
    %v163 = vmul.f32 %v101, %v154
    %v164 = vmul.f32 %v102, %v154
    %v165 = vmul.f32 %v103, %v154
    %v166 = vmul.f32 %v104, %v154
    %v167 = vld [vmem:[#allocation5] sm:$0x3f]
    %v169 = vperm.slane %v167, 0
    %v170 = vperm.slane %v167, 1
    %v171 = vperm.slane %v167, 2
    %v172 = vperm.slane %v167, 3
    %v173 = vperm.slane %v167, 4
    %v174 = vperm.slane %v167, 5
    %v181 = vmul.f32 %v155, %v169
    %v182 = vmul.f32 %v156, %v170
    %v183 = vmul.f32 %v157, %v171
    %v184 = vmul.f32 %v158, %v172
    %v185 = vmul.f32 %v159, %v173
    %v186 = vmul.f32 %v160, %v174
    %v187 = vmul.f32 %v161, %v169
    %v188 = vmul.f32 %v162, %v170
    %v189 = vmul.f32 %v163, %v171
    %v190 = vmul.f32 %v164, %v172
    %v191 = vmul.f32 %v165, %v173
    %v192 = vmul.f32 %v166, %v174
    %v193 = vld [vmem:[#allocation7] sm:$0x3f]
    %v195 = vperm.slane %v193, 0
    %v196 = vperm.slane %v193, 1
    %v197 = vperm.slane %v193, 2
    %v198 = vperm.slane %v193, 3
    %v199 = vperm.slane %v193, 4
    %v200 = vperm.slane %v193, 5
    %v207 = vadd.f32 %v181, %v195
    %v208 = vadd.f32 %v182, %v196
    %v209 = vadd.f32 %v183, %v197
    %v210 = vadd.f32 %v184, %v198
    %v211 = vadd.f32 %v185, %v199
    %v212 = vadd.f32 %v186, %v200
    %v213 = vadd.f32 %v187, %v195
    %v214 = vadd.f32 %v188, %v196
    %v215 = vadd.f32 %v189, %v197
    %v216 = vadd.f32 %v190, %v198
    %v217 = vadd.f32 %v191, %v199
    %v218 = vadd.f32 %v192, %v200
    %219 = vst [vmem:[#allocation8] sm:$0xff] %v207
    %220 = vst [vmem:[#allocation8 + $0x8] sm:$0xff] %v208
    %221 = vst [vmem:[#allocation8 + $0x10] sm:$0xff] %v209
    %222 = vst [vmem:[#allocation8 + $0x18] sm:$0xff] %v210
    %223 = vst [vmem:[#allocation8 + $0x20] sm:$0xff] %v211
    %224 = vst [vmem:[#allocation8 + $0x28] sm:$0xff] %v212
    %225 = vst [vmem:[#allocation8 + $0x30] sm:$0xff] %v213
    %226 = vst [vmem:[#allocation8 + $0x38] sm:$0xff] %v214
    %227 = vst [vmem:[#allocation8 + $0x40] sm:$0xff] %v215
    %228 = vst [vmem:[#allocation8 + $0x48] sm:$0xff] %v216
    %229 = vst [vmem:[#allocation8 + $0x50] sm:$0xff] %v217
    %230 = vst [vmem:[#allocation8 + $0x58] sm:$0xff] %v218
    // Predicated region
    $region26: #{tpu_custom_call.1} parent=1 // pred_check
      _
    $region27: #{tpu_custom_call.1} parent=1 // pred_check_branch
      %232 = sbr.rel (0) target = $region29
    $region28: #{tpu_custom_call.1} parent=1 // pred_region
      %234 = vsyncadd [#allocation4], 0
      %s235 = sshll.u32 [#allocation8], 4
      %s236 = int_to_ptr.vmem [resolvable:$true] %s235
      %s237 = sshll.u32 %s3, 4
      %s238 = int_to_ptr.hbm [resolvable:$true] %s237
      %243 = dma.vmem_to_hbm [thread:$0]  %s236, 1536, %s238, [#allocation4], 768, 768, 48
    $region29: #{tpu_custom_call.1} parent=1 // pred_fallthru
      _
    // Predicated region
    $region30: #{tpu_custom_call.1} parent=1 // pred_check
      _
    $region31: #{tpu_custom_call.1} parent=1 // pred_check_branch
      %245 = sbr.rel (0) target = $region33
    $region32: #{tpu_custom_call.1} parent=1 // pred_region
      %247 = dma.done [#allocation4], 1536
    $region33: #{tpu_custom_call.1} parent=1 // pred_fallthru
      _
    %248 = vsyncpa [#allocation3], 1
    %249 = vsyncpa [#allocation6], 1
    %250 = vsyncpa [#allocation4], 1

</llo_original>
